<compile_context>
chip_gen: v5e
topology: v5e:2x2
jax: 0.10.0
libtpu: 0.0.40
codegen_flags: <defaults>
</compile_context>

<pallas_src>
import math
from functools import partial

import numpy as np
import jax
import jax.numpy as jnp
from jax.experimental import pallas as pl
from jax.experimental.pallas import tpu as pltpu


# ---------------------------------------------------------------------------
# Host-side fold: exact per-frame temporal weights per pooling branch.
# ---------------------------------------------------------------------------
def _adaptive_pool_matrix(t_in, t_out):
    A = np.zeros((t_out, t_in), np.float32)
    for j in range(t_out):
        s = (j * t_in) // t_out
        e = math.ceil((j + 1) * t_in / t_out)
        A[j, s:e] = 1.0 / (e - s)
    return A


def _linear_interp_matrix(t_dst, t_src):
    # Matches F.interpolate(mode='trilinear', align_corners=False) on the
    # temporal axis (spatial size unchanged -> identity).
    M = np.zeros((t_dst, t_src), np.float32)
    scale = t_src / t_dst
    for t in range(t_dst):
        src = max(scale * (t + 0.5) - 0.5, 0.0)
        i0 = int(np.floor(src))
        i1 = min(i0 + 1, t_src - 1)
        frac = src - i0
        M[t, i0] += 1.0 - frac
        M[t, i1] += frac
    return M


def make_beta(num_frames, frames, pool_sizes):
    """beta[p, f]: weight of input frame f in mean_T(branch_p(x)); exact fold of
    adaptive temporal pooling + trilinear upsampling + temporal mean."""
    # TODO(synk): validate beta once against real torch AdaptiveAvgPool3d /
    # F.interpolate for the ps > num_frames / t_out != frames corner cases.
    betas = []
    for ps in pool_sizes:
        if ps <= num_frames:
            t_out = num_frames // ps
            A = _adaptive_pool_matrix(frames, t_out)
            M = _linear_interp_matrix(frames, t_out) @ A if t_out != frames else A
            betas.append(M.mean(axis=0))
        else:  # nn.Identity branch
            betas.append(np.full((frames,), 1.0 / frames, np.float32))
    return np.stack(betas, axis=0).astype(np.float32)  # (P, frames)


# ---------------------------------------------------------------------------
# Hardware-aware sizing helpers.
# ---------------------------------------------------------------------------
def _vmem_capacity_bytes():
    try:
        return int(pltpu.get_tpu_info().vmem_capacity_bytes)
    except Exception:
        return 64 * 2**20            # conservative (v7x per-TensorCore size)


def _pick_hw_tile(hw_pad, frames, channels, itemsize, max_block_bytes):
    """Largest multiple of 128 dividing hw_pad whose (F, C, tile) block fits budget."""
    per_lane = frames * channels * itemsize
    budget = max(128, (max_block_bytes // max(per_lane, 1)) // 128 * 128)
    t = min(hw_pad, budget)
    while t > 128 and hw_pad % t != 0:
        t -= 128
    return t


# ---------------------------------------------------------------------------
# Pass 1: per-(batch, hw-tile) partial channel means (fully parallel grid).
# ---------------------------------------------------------------------------
def _stats_kernel(x_ref, o_ref, *, inv_count):
    # x_ref: (F, C, hw_t) in the input dtype; o_ref: (1, C) f32 partial mean.
    xb = x_ref[...]
    # Sum frames first (VPU adds with f32 accumulation), then a single
    # cross-lane reduce per channel row (instead of F*C XLU reductions).
    s = jnp.sum(xb.astype(jnp.float32), axis=0)                 # (C, hw_t)
    o_ref[...] = (jnp.sum(s, axis=-1) * inv_count).reshape(1, -1)


# ---------------------------------------------------------------------------
# Pass 2: temporal mix + 1x1-conv fusion as one MXU matmul (K = F*C).
# ---------------------------------------------------------------------------
def _fuse_kernel(x_ref, weff_ref, bfuse_ref, o_ref):
    F, C, HWt = x_ref.shape
    # Free relayout when C is a multiple of the sublane tile (8 for f32,
    # 16 for bf16); the MXU accumulates in f32 internally.
    x2d = x_ref[...].reshape(F * C, HWt)
    acc = jnp.dot(weff_ref[...], x2d, preferred_element_type=jnp.float32)
    o_ref[...] = (acc + bfuse_ref[...]).astype(o_ref.dtype)


# ---------------------------------------------------------------------------
# Wrapper
# ---------------------------------------------------------------------------
def adaptive_temporal_pooling(x, sel_w, sel_b, fuse_w, fuse_b, num_frames, pool_sizes):
    """x: (B, frames, C, H, W) -> (B, C, H, W), matching the PyTorch module."""
    B, F, C, H, W = x.shape
    P = len(pool_sizes)
    HW = H * W

    if x.dtype not in (jnp.float32, jnp.bfloat16):
        x = x.astype(jnp.float32)
    mm_dtype = x.dtype if x.dtype == jnp.bfloat16 else jnp.float32
    itemsize = np.dtype(x.dtype).itemsize
    mm_itemsize = np.dtype(mm_dtype).itemsize

    # Native layout: pure reshape (no transpose). Pad the spatial axis to a
    # lane multiple so every block is lane-dense; zero padding contributes
    # nothing to the mean and is cropped on output.
    HW_pad = ((HW + 127) // 128) * 128
    x_k = x.reshape(B, F, C, HW)
    if HW_pad != HW:
        x_k = jnp.pad(x_k, ((0, 0), (0, 0), (0, 0), (0, HW_pad - HW)))

    beta = jnp.asarray(make_beta(num_frames, F, pool_sizes))               # (P, F)
    wselT = jnp.asarray(sel_w, jnp.float32).T                              # (C, P)
    bsel = jnp.asarray(sel_b, jnp.float32).reshape(1, P)
    wfuse = jnp.asarray(fuse_w, jnp.float32)[:, :, 0, 0]                   # (Cout, Cin)
    bfuse = jnp.asarray(fuse_b, jnp.float32).reshape(C, 1)

    # Generation-aware tile budget and explicit VMEM limit.
    vmem_cap = _vmem_capacity_bytes()
    max_block_bytes = (3 * 2**20) if vmem_cap <= 72 * 2**20 else (6 * 2**20)
    hw_t = _pick_hw_tile(HW_pad, F, C, itemsize, max_block_bytes)
    n_hw = HW_pad // hw_t

    x_blk = F * C * hw_t * itemsize
    out_blk = C * hw_t * itemsize
    w_blk = C * F * C * mm_itemsize + 2 * C * 4
    needed = 2 * (x_blk + out_blk + w_blk) + (2 << 20)        # dbl-buffer + headroom
    vmem_limit = int(min(0.7 * vmem_cap, 48 * 2**20))
    vmem_limit = max(vmem_limit, needed)

    # ---- pass 1: partial channel means, both grid axes parallel ----
    partials = pl.pallas_call(
        partial(_stats_kernel, inv_count=1.0 / (F * HW)),
        out_shape=jax.ShapeDtypeStruct((B, n_hw, 1, C), jnp.float32),
        grid_spec=pltpu.PrefetchScalarGridSpec(
            num_scalar_prefetch=0,
            grid=(B, n_hw),
            in_specs=[pl.BlockSpec((None, F, C, hw_t), lambda b, h: (b, 0, 0, h))],
            out_specs=pl.BlockSpec((None, None, 1, C), lambda b, h: (b, h, 0, 0)),
        ),
        compiler_params=pltpu.CompilerParams(
            dimension_semantics=("parallel", "parallel"),
            vmem_limit_bytes=vmem_limit),
        cost_estimate=pl.CostEstimate(
            flops=int(B * F * C * HW_pad),
            transcendentals=0,
            bytes_accessed=int(B * F * C * HW_pad * itemsize + B * n_hw * C * 4)),
    )(x_k)

    # ---- tiny data-dependent math in XLA: selector -> softmax -> gamma -> W_eff ----
    g = jnp.sum(partials, axis=(1, 2))                                     # (B, C)
    logits = g @ wselT + bsel                                              # (B, P)
    pw = jax.nn.softmax(logits, axis=-1)                                   # (B, P)
    gamma = pw @ beta                                                      # (B, F)
    # Fold the per-frame mix into the 1x1-conv weight: W_eff[b,o,f*C+c] = gamma[b,f]*Wfuse[o,c]
    w_eff = jnp.einsum('bf,oc->bofc', gamma, wfuse).reshape(B, C, F * C)
    w_eff = w_eff.astype(mm_dtype)

    # ---- pass 2: out[b] = W_eff[b] @ x[b].reshape(F*C, HW) + b_fuse ----
    out = pl.pallas_call(
        _fuse_kernel,
        out_shape=jax.ShapeDtypeStruct((B, C, HW_pad), x.dtype),
        grid_spec=pltpu.PrefetchScalarGridSpec(
            num_scalar_prefetch=0,
            grid=(B, n_hw),
            in_specs=[
                pl.BlockSpec((None, F, C, hw_t), lambda b, h: (b, 0, 0, h)),
                pl.BlockSpec((None, C, F * C), lambda b, h: (b, 0, 0)),
                pl.BlockSpec((C, 1), lambda b, h: (0, 0)),
            ],
            out_specs=pl.BlockSpec((None, C, hw_t), lambda b, h: (b, 0, h)),
        ),
        compiler_params=pltpu.CompilerParams(
            dimension_semantics=("parallel", "parallel"),
            vmem_limit_bytes=vmem_limit),
        cost_estimate=pl.CostEstimate(
            flops=int(2 * B * C * F * C * HW_pad),
            transcendentals=0,
            bytes_accessed=int(B * F * C * HW_pad * itemsize
                               + B * C * HW_pad * itemsize
                               + B * C * F * C * mm_itemsize + 2 * C * 4)),
    )(x_k, w_eff, bfuse)

    return out[:, :, :HW].reshape(B, C, H, W)


# ---------------------------------------------------------------------------
# Pure-JAX reference (direct transcription of the PyTorch forward).
# ---------------------------------------------------------------------------
def ref_forward(x, sel_w, sel_b, fuse_w, fuse_b, num_frames, pool_sizes):
    B, F, C, H, W = x.shape
    x3d = jnp.transpose(x, (0, 2, 1, 3, 4))                                # (B,C,T,H,W)
    g = jnp.mean(x3d, axis=(2, 3, 4))                                      # (B,C)
    logits = g @ jnp.asarray(sel_w).T + jnp.asarray(sel_b)
    pw = jax.nn.softmax(logits, axis=1)                                    # (B,P)

    adaptive = jnp.zeros_like(x3d)
    for i, ps in enumerate(pool_sizes):
        if ps <= num_frames:
            t_out = num_frames // ps
            bins = []
            for j in range(t_out):
                s = (j * F) // t_out
                e = math.ceil((j + 1) * F / t_out)
                bins.append(jnp.mean(x3d[:, :, s:e], axis=2))
            pooled = jnp.stack(bins, axis=2)                               # (B,C,t_out,H,W)
            if t_out != F:
                scale = t_out / F
                frames_out = []
                for t in range(F):
                    src = max(scale * (t + 0.5) - 0.5, 0.0)
                    i0 = int(np.floor(src))
                    i1 = min(i0 + 1, t_out - 1)
                    frac = src - i0
                    frames_out.append((1.0 - frac) * pooled[:, :, i0]
                                      + frac * pooled[:, :, i1])
                pooled = jnp.stack(frames_out, axis=2)                     # (B,C,F,H,W)
        else:
            pooled = x3d
        adaptive = adaptive + pw[:, i][:, None, None, None, None] * pooled

    out = jnp.mean(adaptive, axis=2)                                       # (B,C,H,W)
    out = (jnp.einsum('bchw,oc->bohw', out, jnp.asarray(fuse_w)[:, :, 0, 0])
           + jnp.asarray(fuse_b)[None, :, None, None])
    return out


if __name__ == "__main__":
    pool_sizes = [2, 4, 8]

    def run_case(name, dtype, B, F, C, H, W, tol):
        num_frames = F
        P = len(pool_sizes)
        key = jax.random.PRNGKey(0)
        k1, k2, k3, k4, k5 = jax.random.split(key, 5)
        sel_w = 0.1 * jax.random.normal(k1, (P, C), jnp.float32)
        sel_b = 0.1 * jax.random.normal(k2, (P,), jnp.float32)
        fuse_w = 0.1 * jax.random.normal(k3, (C, C, 1, 1), jnp.float32)
        fuse_b = 0.1 * jax.random.normal(k4, (C,), jnp.float32)
        x = jax.random.normal(k5, (B, F, C, H, W), jnp.float32).astype(dtype)

        out = adaptive_temporal_pooling(x, sel_w, sel_b, fuse_w, fuse_b,
                                        num_frames, pool_sizes)
        out = jax.block_until_ready(out)
        ref = ref_forward(x.astype(jnp.float32), sel_w, sel_b, fuse_w, fuse_b,
                          num_frames, pool_sizes)
        ref = jax.block_until_ready(ref)

        assert out.shape == (B, C, H, W), (name, out.shape)
        err = float(jnp.max(jnp.abs(out.astype(jnp.float32) - ref)))
        scale = float(jnp.max(jnp.abs(ref))) + 1e-6
        assert err / scale < tol, f"{name}: rel err {err / scale:.5f} (abs {err:.5f})"

    # f32, spatial axis already a multiple of 128 (lane-dense, no padding path)
    run_case("f32_hw256", jnp.float32, B=2, F=8, C=16, H=16, W=16, tol=2e-4)
    # bf16, spatial axis NOT a multiple of 128 (exercises padding + bf16 MXU path)
    run_case("bf16_hw144", jnp.bfloat16, B=2, F=8, C=16, H=12, W=12, tol=8e-2)

    print("KERNEL_OK")
</pallas_src>

<mosaic_0001>
module attributes {stable_mosaic.version = 11 : i64} {
  func.func @_stats_kernel(%arg0: i32, %arg1: i32, %arg2: memref<1x8x16x256xf32, #tpu.memory_space<vmem>>, %arg3: memref<1x1x1x16xf32, #tpu.memory_space<vmem>>) attributes {dimension_semantics = [#tpu.dimension_semantics<parallel>, #tpu.dimension_semantics<parallel>], iteration_bounds = array<i64: 2, 1>, scalar_prefetch = 0 : i64, scratch_operands = 0 : i64, tpu.core_type = #tpu.core_type<tc>, window_params = [{transform_indices = @transform_0, window_bounds = array<i64: 1, 8, 16, 256>}, {transform_indices = @transform_1, window_bounds = array<i64: 1, 1, 1, 16>}]} {
    %c0 = arith.constant 0 : index
    %c0_0 = arith.constant 0 : index
    %c0_1 = arith.constant 0 : index
    %c0_2 = arith.constant 0 : index
    %0 = vector.load %arg2[%c0, %c0_0, %c0_1, %c0_2] : memref<1x8x16x256xf32, #tpu.memory_space<vmem>>, vector<1x8x16x256xf32>
    %1 = vector.shape_cast %0 : vector<1x8x16x256xf32> to vector<8x16x256xf32>
    %cst = arith.constant dense<0.000000e+00> : vector<16x256xf32>
    %2 = vector.multi_reduction <add>, %1, %cst [0] : vector<8x16x256xf32> to vector<16x256xf32>
    %cst_3 = arith.constant dense<0.000000e+00> : vector<16xf32>
    %3 = vector.multi_reduction <add>, %2, %cst_3 [1] : vector<16x256xf32> to vector<16xf32>
    %cst_4 = arith.constant 4.8828125E-4 : f32
    %4 = vector.broadcast %cst_4 : f32 to vector<16xf32>
    %5 = arith.mulf %3, %4 : vector<16xf32>
    %6 = vector.shape_cast %5 : vector<16xf32> to vector<1x16xf32>
    %c0_5 = arith.constant 0 : index
    %c0_6 = arith.constant 0 : index
    %c0_7 = arith.constant 0 : index
    %c0_8 = arith.constant 0 : index
    %7 = vector.load %arg3[%c0_5, %c0_6, %c0_7, %c0_8] : memref<1x1x1x16xf32, #tpu.memory_space<vmem>>, vector<1x1x1x16xf32>
    %8 = vector.shape_cast %7 : vector<1x1x1x16xf32> to vector<1x16xf32>
    %9 = vector.shape_cast %6 : vector<1x16xf32> to vector<1x1x1x16xf32>
    tpu.vector_store %arg3[%c0_5, %c0_6, %c0_7, %c0_8], %9 {strides = array<i32>} : memref<1x1x1x16xf32, #tpu.memory_space<vmem>>, vector<1x1x1x16xf32>,
    return
  }
  func.func @transform_0(%arg0: i32, %arg1: i32) -> (i32, i32, i32, i32) {
    %c0_i32 = arith.constant 0 : i32
    %c0_i32_0 = arith.constant 0 : i32
    %c0_i32_1 = arith.constant 0 : i32
    return %arg0, %c0_i32, %c0_i32_0, %arg1 : i32, i32, i32, i32
  }
  func.func @transform_1(%arg0: i32, %arg1: i32) -> (i32, i32, i32, i32) {
    %c0_i32 = arith.constant 0 : i32
    %c0_i32_0 = arith.constant 0 : i32
    %c0_i32_1 = arith.constant 0 : i32
    return %arg0, %arg1, %c0_i32, %c0_i32_0 : i32, i32, i32, i32
  }
}

</mosaic_0001>

<llo_original>
// kernel: tpu_custom_call.1
$region0: #{tpu_custom_call.1}
  #allocation0 [shape = 'u32[]', space=smem, size = 0x4, offset = 0x4, fixed_abs, tag = 'smem constant byte address 0x4 - core index']
  #allocation1 [shape = 'u32[72,128]{1,0:T(1,128)}', space=vmem, size = 0x9000, scoped, tag = 'internal scratch']
  %s0 = inlined_call_operand.hbm [shape: f32[2,8,16,256], index: 0, kind: input, shape index: {}]
  %s1 = inlined_call_operand.hbm [shape: f32[2,1,1,16], index: 1, kind: output, shape index: {}]
  %s2 = sld [smem:[#allocation0]]
  $region41: #{tpu_custom_call.1} parent=0
    _
  %s4 = ssub.s32 1, %s2
  %s5 = scalar_select 0, %s4, %s2
  $region1: #{tpu_custom_call.1} parent=0
    #allocation2 [shape = 'u8[262144]{0}', space=vmem, size = 0x40000, scoped, tag = 'input window, operand 0']
    #allocation3 [shape = 's32[2]{0}', space=sflag, size = 0x8, scoped, tag = 'scoped memory for tpu_custom_call.1']
    #allocation4 [shape = 's32[2]{0}', space=sflag, size = 0x8, scoped, tag = 'scoped memory for tpu_custom_call.1']
    #allocation5 [shape = 'u8[1024]{0}', space=vmem, size = 0x400, scoped, tag = 'output window, operand 0']
    %6 = vsyncpa [#allocation3], 0
    %s7 = scalar_lea.sflag [#allocation3], 1
    %8 = vsyncpa %s7, 0
    %9 = vsyncpa [#allocation4], 0
    %s10 = scalar_lea.sflag [#allocation4], 1
    %11 = vsyncpa %s10, 0
    loop: start=0, step=1, limit=4
    $region2: #{tpu_custom_call.1} parent=1 // loop_pre_header
      _
    $region3: #{tpu_custom_call.1} parent=1 // loop_header
      %s13 = sphi 0, %s17
      %p14 = scmp.ge.s32.totalorder %s13, 4
      %s20 = sphi 0, %s32
      %s21 = sphi 0, %s28
      %s22 = sphi 0, %s20
      %s23 = sphi 0, %s21
      %s24 = sphi 0, %s22
      %s25 = sphi 0, %s23
      %s37 = sphi 0, %s39
      %s40 = sphi 0, %s37
      %s41 = sphi 0, %s40
      %s57 = sphi 0, %s41
      %s65 = sphi 0, %s67
      %s68 = sphi 0, %s65
      %s69 = sphi 0, %s68
      %s85 = sphi 0, %s69
    $region4: #{tpu_custom_call.1} parent=1 // loop_header_branch
      %16 = sbr.rel (%p14) target = $region8
    $region5: #{tpu_custom_call.1} parent=1 // loop_body
      %s18 = ssub.s32 %s13, 1
      %s19 = ssub.s32 %s13, 2
      %s26 = sadd.s32 1, %s21
      %p27 = scmp.ge.s32.totalorder %s26, 1
      %s28 = scalar_select %p27, 0, %s26
      %s29 = sadd.s32 1, %s20
      %s30 = scalar_select %p27, %s29, %s20
      %p31 = scmp.ge.s32.totalorder %s30, 2
      %s32 = scalar_select %p31, 0, %s30
      %s33 = ssub.s32 %s20, %s32
      %s34 = ssub.s32 %s21, %s28
      %s35 = sor.u32 %s33, %s34
      %p36 = scmp.eq.s32.totalorder %s35, 0
      %s38 = sadd.s32 %s37, 1
      %s39 = scalar_select %p36, %s37, %s38
      %p42 = pneg %p36
      %p43 = scmp.eq.s32.totalorder %s13, 1
      %p44 = por %p42, %p43
      %p45 = scmp.ne.s32.totalorder %s37, %s40
      %p46 = scmp.eq.s32.totalorder %s13, 0
      %p47 = por %p45, %p46
      %p48 = scmp.ne.s32.totalorder %s37, %s40
      %p49 = scmp.eq.s32.totalorder %s18, 1
      %p50 = por %p48, %p49
      %p51 = scmp.ne.s32.totalorder %s40, %s41
      %p52 = scmp.eq.s32.totalorder %s18, 0
      %p53 = por %p51, %p52
      %p54 = scmp.ne.s32.totalorder %s40, %s41
      %p55 = scmp.eq.s32.totalorder %s19, 1
      %p56 = por %p54, %p55
      %p58 = scmp.ne.s32.totalorder %s41, %s57
      %p59 = scmp.eq.s32.totalorder %s19, 0
      %p60 = por %p58, %p59
      %s61 = ssub.s32 %s20, %s32
      %s62 = ssub.s32 %s21, %s28
      %s63 = sor.u32 %s61, %s62
      %p64 = scmp.eq.s32.totalorder %s63, 0
      %s66 = sadd.s32 %s65, 1
      %s67 = scalar_select %p64, %s65, %s66
      %p70 = pneg %p64
      %p71 = scmp.eq.s32.totalorder %s13, 1
      %p72 = por %p70, %p71
      %p73 = scmp.ne.s32.totalorder %s65, %s68
      %p74 = scmp.eq.s32.totalorder %s13, 0
      %p75 = por %p73, %p74
      %p76 = scmp.ne.s32.totalorder %s65, %s68
      %p77 = scmp.eq.s32.totalorder %s18, 1
      %p78 = por %p76, %p77
      %p79 = scmp.ne.s32.totalorder %s68, %s69
      %p80 = scmp.eq.s32.totalorder %s18, 0
      %p81 = por %p79, %p80
      %p82 = scmp.ne.s32.totalorder %s68, %s69
      %p83 = scmp.eq.s32.totalorder %s19, 1
      %p84 = por %p82, %p83
      %p86 = scmp.ne.s32.totalorder %s69, %s85
      %p87 = scmp.eq.s32.totalorder %s19, 0
      %p88 = por %p86, %p87
      %p89 = scmp.le.s32.totalorder 1, %s13
      %p90 = scmp.lt.s32.totalorder %s13, 3
      %p91 = pnand %p89, %p90
      %p92 = pneg %p91
      // Predicated region
      $region9: #{tpu_custom_call.1} parent=5 // pred_check
        _
      $region10: #{tpu_custom_call.1} parent=5 // pred_check_branch
        %94 = sbr.rel (%p91) target = $region12
      $region11: #{tpu_custom_call.1} parent=5 // pred_region
        %s95 = ssub.s32 %s13, 1
      $region12: #{tpu_custom_call.1} parent=5 // pred_fallthru
        _
      %p96 = scmp.lt.s32.totalorder %s13, 2
      // Predicated region
      $region13: #{tpu_custom_call.1} parent=5 // pred_check
        %p97 = pneg %p96
      $region14: #{tpu_custom_call.1} parent=5 // pred_check_branch
        %99 = sbr.rel (%p97) target = $region16
      $region15: #{tpu_custom_call.1} parent=5 // pred_region
        // Predicated region
        $region17: #{tpu_custom_call.1} parent=15 // pred_check
          %p100 = pneg %p47
        $region18: #{tpu_custom_call.1} parent=15 // pred_check_branch
          %102 = sbr.rel (%p100) target = $region20
        $region19: #{tpu_custom_call.1} parent=15 // pred_region
          %s103 = sand.u32 %s37, 1
          %s104 = scalar_lea.sflag [#allocation3], %s103
          %s105 = sand.u32 %s37, 1
          %s106 = smul.addr %s105, 256
          %s107 = scalar_lea.vmem [#allocation2], %s106
          %s108 = smul.u32 2, %s21
          %110 = vsyncadd %s104, 0
          %s111 = smul.addr %s20, 32
          %s112 = sadd.s32 %s108, %s111
          %s113 = smul.addr %s112, 8
          %s114 = scalar_lea.hbm %s0, %s113
          %s115 = sshll.u32 %s114, 4
          %s116 = int_to_ptr.hbm [resolvable:$true] %s115
          %s117 = sshll.u32 %s107, 4
          %s118 = int_to_ptr.vmem [resolvable:$true] %s117
          %123 = dma.hbm_to_vmem [thread:$0]  %s116, 4096, %s118, %s104, 256, 256, 16
        $region20: #{tpu_custom_call.1} parent=15 // pred_fallthru
          _
      $region16: #{tpu_custom_call.1} parent=5 // pred_fallthru
        _
      %p124 = scmp.le.s32.totalorder 1, %s13
      %p125 = scmp.lt.s32.totalorder %s13, 3
      %p126 = pnand %p124, %p125
      %p127 = pneg %p126
      // Predicated region
      $region21: #{tpu_custom_call.1} parent=5 // pred_check
        _
      $region22: #{tpu_custom_call.1} parent=5 // pred_check_branch
        %129 = sbr.rel (%p126) target = $region24
      $region23: #{tpu_custom_call.1} parent=5 // pred_region
        %s130 = ssub.s32 %s13, 1
        %s131 = sand.u32 %s40, 1
        %s132 = scalar_lea.sflag [#allocation3], %s131
        %s133 = sand.u32 %s40, 1
        %s134 = smul.addr %s133, 256
        %s135 = scalar_lea.vmem [#allocation2], %s134
        // Predicated region
        $region25: #{tpu_custom_call.1} parent=23 // pred_check
          %p136 = pneg %p53
        $region26: #{tpu_custom_call.1} parent=23 // pred_check_branch
          %138 = sbr.rel (%p136) target = $region28
        $region27: #{tpu_custom_call.1} parent=23 // pred_region
          %140 = dma.done %s132, 4096
        $region28: #{tpu_custom_call.1} parent=23 // pred_fallthru
          _
        %s141 = sand.u32 %s40, 1
        %s142 = scalar_lea.sflag [#allocation3], %s141
        %s143 = sand.u32 %s40, 1
        %s144 = smul.addr %s143, 256
        %s145 = scalar_lea.vmem [#allocation2], %s144
        %p146 = pneg %p53
        %p147 = pneg %p50
        %p148 = pneg %p81
        %p149 = pneg %p78
        %s150 = sand.u32 %s68, 1
        %s151 = scalar_lea.sflag [#allocation4], %s150
        %s152 = sand.u32 %s68, 1
        %s153 = scalar_lea.vmem [#allocation5], %s152
        %s154 = smul.u32 2, %s23
        %v155 = vld [vmem:[%s135] sm:$0xff]
        %v156 = vld [vmem:[%s135 + $0x8] sm:$0xff]
        %v157 = vld [vmem:[%s135 + $0x10] sm:$0xff]
        %v158 = vld [vmem:[%s135 + $0x18] sm:$0xff]
        %v159 = vld [vmem:[%s135 + $0x20] sm:$0xff]
        %v160 = vld [vmem:[%s135 + $0x28] sm:$0xff]
        %v161 = vld [vmem:[%s135 + $0x30] sm:$0xff]
        %v162 = vld [vmem:[%s135 + $0x38] sm:$0xff]
        %v163 = vld [vmem:[%s135 + $0x40] sm:$0xff]
        %v164 = vld [vmem:[%s135 + $0x48] sm:$0xff]
        %v165 = vld [vmem:[%s135 + $0x50] sm:$0xff]
        %v166 = vld [vmem:[%s135 + $0x58] sm:$0xff]
        %v167 = vld [vmem:[%s135 + $0x60] sm:$0xff]
        %v168 = vld [vmem:[%s135 + $0x68] sm:$0xff]
        %v169 = vld [vmem:[%s135 + $0x70] sm:$0xff]
        %v170 = vld [vmem:[%s135 + $0x78] sm:$0xff]
        %v171 = vld [vmem:[%s135 + $0x80] sm:$0xff]
        %v172 = vld [vmem:[%s135 + $0x88] sm:$0xff]
        %v173 = vld [vmem:[%s135 + $0x90] sm:$0xff]
        %v174 = vld [vmem:[%s135 + $0x98] sm:$0xff]
        %v175 = vld [vmem:[%s135 + $0xa0] sm:$0xff]
        %v176 = vld [vmem:[%s135 + $0xa8] sm:$0xff]
        %v177 = vld [vmem:[%s135 + $0xb0] sm:$0xff]
        %v178 = vld [vmem:[%s135 + $0xb8] sm:$0xff]
        %v179 = vld [vmem:[%s135 + $0xc0] sm:$0xff]
        %v180 = vld [vmem:[%s135 + $0xc8] sm:$0xff]
        %v181 = vld [vmem:[%s135 + $0xd0] sm:$0xff]
        %v182 = vld [vmem:[%s135 + $0xd8] sm:$0xff]
        %v183 = vld [vmem:[%s135 + $0xe0] sm:$0xff]
        %v184 = vld [vmem:[%s135 + $0xe8] sm:$0xff]
        %v185 = vld [vmem:[%s135 + $0xf0] sm:$0xff]
        %v186 = vld [vmem:[%s135 + $0xf8] sm:$0xff]
        %v187 = vadd.f32 %v155, %v159
        %v188 = vadd.f32 %v187, %v163
        %v189 = vadd.f32 %v188, %v167
        %v190 = vadd.f32 %v189, %v171
        %v191 = vadd.f32 %v190, %v175
        %v192 = vadd.f32 %v191, %v179
        %v193 = vadd.f32 %v192, %v183
        %v194 = vadd.f32 %v156, %v160
        %v195 = vadd.f32 %v194, %v164
        %v196 = vadd.f32 %v195, %v168
        %v197 = vadd.f32 %v196, %v172
        %v198 = vadd.f32 %v197, %v176
        %v199 = vadd.f32 %v198, %v180
        %v200 = vadd.f32 %v199, %v184
        %v201 = vadd.f32 %v157, %v161
        %v202 = vadd.f32 %v201, %v165
        %v203 = vadd.f32 %v202, %v169
        %v204 = vadd.f32 %v203, %v173
        %v205 = vadd.f32 %v204, %v177
        %v206 = vadd.f32 %v205, %v181
        %v207 = vadd.f32 %v206, %v185
        %v208 = vadd.f32 %v158, %v162
        %v209 = vadd.f32 %v208, %v166
        %v210 = vadd.f32 %v209, %v170
        %v211 = vadd.f32 %v210, %v174
        %v212 = vadd.f32 %v211, %v178
        %v213 = vadd.f32 %v212, %v182
        %v214 = vadd.f32 %v213, %v186
        %v215 = vadd.f32 %v193, %v200
        %216 = vadd.xlane.f32.xlu0 %v215
        %v217 = vpop.xlane.xlu0 %216
        %v218 = vadd.f32 %v207, %v214
        %219 = vadd.xlane.f32.xlu0 %v218
        %v220 = vpop.xlane.xlu0 %219
        %v221 = vmul.f32 %v217, 0.00048828125
        %v222 = vmul.f32 %v220, 0.00048828125
        %v225 = vlaneseq
        %v226 = vand.u32 %v225, 127
        %v227 = vperm.slane %v221, %v226
        %v228 = vadd.s32 %v226, 4294967288
        %v229 = vperm.slane %v222, %v228
        %vm230 = vcmask 130112
        %v231 = vsel %vm230, %v229, %v227
        %vm233 = vcmask 122880
        %234 = vst.msk [vmem:[%s153] sm:$0x1] %vm233, %v231
        %s235 = sand.u32 %s68, 1
        %s236 = scalar_lea.sflag [#allocation4], %s235
        %s237 = sand.u32 %s68, 1
        %s238 = scalar_lea.vmem [#allocation5], %s237
        // Predicated region
        $region29: #{tpu_custom_call.1} parent=23 // pred_check
          %p239 = pneg %p78
        $region30: #{tpu_custom_call.1} parent=23 // pred_check_branch
          %241 = sbr.rel (%p239) target = $region32
        $region31: #{tpu_custom_call.1} parent=23 // pred_region
          %243 = vsyncadd %s236, 0
          %s244 = sadd.s32 %s23, %s22
          %s245 = scalar_lea.hbm %s1, %s244
          %s247 = sshll.u32 %s238, 4
          %s248 = int_to_ptr.vmem [resolvable:$true] %s247
          %s249 = sshll.u32 %s245, 4
          %s250 = int_to_ptr.hbm [resolvable:$true] %s249
          %252 = dma.vmem_to_hbm [thread:$0]  %s248, 16, %s250, %s236
        $region32: #{tpu_custom_call.1} parent=23 // pred_fallthru
          _
      $region24: #{tpu_custom_call.1} parent=5 // pred_fallthru
        _
      %p253 = scmp.le.s32.totalorder 2, %s13
      // Predicated region
      $region33: #{tpu_custom_call.1} parent=5 // pred_check
        %p254 = pneg %p253
      $region34: #{tpu_custom_call.1} parent=5 // pred_check_branch
        %256 = sbr.rel (%p254) target = $region36
      $region35: #{tpu_custom_call.1} parent=5 // pred_region
        %s257 = ssub.s32 %s13, 2
        // Predicated region
        $region37: #{tpu_custom_call.1} parent=35 // pred_check
          %p258 = pneg %p84
        $region38: #{tpu_custom_call.1} parent=35 // pred_check_branch
          %260 = sbr.rel (%p258) target = $region40
        $region39: #{tpu_custom_call.1} parent=35 // pred_region
          %s261 = sand.u32 %s69, 1
          %s262 = scalar_lea.sflag [#allocation4], %s261
          %s263 = sand.u32 %s69, 1
          %s264 = scalar_lea.vmem [#allocation5], %s263
          %266 = dma.done %s262, 16
        $region40: #{tpu_custom_call.1} parent=35 // pred_fallthru
          _
      $region36: #{tpu_custom_call.1} parent=5 // pred_fallthru
        _
    $region6: #{tpu_custom_call.1} parent=1 // loop_footer
      %s17 = sadd.s32 1, %s13
    $region7: #{tpu_custom_call.1} parent=1 // loop_footer_branch
      %12 = sbr.rel target = $region3
    $region8: #{tpu_custom_call.1} parent=1 // loop_exit
      _
    %267 = vsyncpa [#allocation3], 1
    %s268 = scalar_lea.sflag [#allocation3], 1
    %269 = vsyncpa %s268, 1
    %270 = vsyncpa [#allocation4], 1
    %s271 = scalar_lea.sflag [#allocation4], 1
    %272 = vsyncpa %s271, 1

</llo_original>
